<compile_context>
chip_gen: v6e
topology: v6e:2x2x1
jax: 0.10.0
libtpu: 0.0.40
codegen_flags: <defaults>
</compile_context>

<pallas_src>
import functools

import jax
import jax.numpy as jnp
from jax.experimental import pallas as pl
from jax.experimental.pallas import tpu as pltpu


def _round_up(x, m):
    return ((x + m - 1) // m) * m


def _vmem_budget_bytes():
    """Per-generation VMEM budget: ~96 MiB on 128 MiB chips, 48 MiB on v7x."""
    phys = 64 * 1024 * 1024
    try:
        info = pltpu.get_tpu_info()
        phys = int(getattr(info, "vmem_capacity_bytes", phys))
    except Exception:
        pass
    if phys >= 128 * 1024 * 1024:
        return 96 * 1024 * 1024
    return 48 * 1024 * 1024


def _estimate_vmem_bytes(tm, kc, c0p, layer_dims, c_last_p):
    """Rough per-step VMEM footprint (double-buffered blocks + intermediates)."""
    max_c = max([c0p] + [co for _, co in layer_dims])
    x_blk = 2 * tm * kc * c0p * 2                       # bf16 input, 2x buffered
    out_blk = 2 * tm * c_last_p * 4                      # f32 output, 2x buffered
    wts = 2 * sum(ci * co * 2 + co * 4 for ci, co in layer_dims)
    act = 3 * tm * kc * max_c * 4                        # f32 + bf16 intermediates + slack
    return x_blk + out_blk + wts + act


def _tm_candidates(M, tm_target):
    m8 = _round_up(M, 8)
    cands = [t for t in (tm_target, 128, 64) if 2 * t <= m8]  # keep >=2 M blocks
    if not cands:
        cands = [min(tm_target, m8)]                          # one padded block
    return cands


def _kc_candidates(K):
    cands = [K]                                               # single-step K first
    for mult in (16, 8):                                      # prefer bf16-dense chunks
        cands += sorted((d for d in range(mult, K, mult) if K % d == 0),
                        reverse=True)
    out, seen = [], set()
    for d in cands:
        if d not in seen:
            seen.add(d)
            out.append(d)
    return out


# ----------------------------------------------------------------------------
# Pallas kernel: chained (matmul + bias + relu) layers, running max over K
# ----------------------------------------------------------------------------
def _make_mlp_max_kernel(n_layers, tm, kc):
    def kernel(x_ref, *rest):
        out_ref = rest[-1]
        wb = rest[:-1]
        j = pl.program_id(1)

        h = x_ref[...]                                  # (tm*kc, C0p) bf16
        h32 = None
        for li in range(n_layers):
            w = wb[2 * li][...]                         # (Cin_p, Cout_p) bf16, BN folded
            b = wb[2 * li + 1][...]                     # (1, Cout_p) f32
            h32 = jnp.dot(h, w, preferred_element_type=jnp.float32) + b
            h32 = jnp.maximum(h32, 0.0)                 # bias + ReLU in f32
            if li + 1 < n_layers:
                h = h32.astype(jnp.bfloat16)            # bf16 into the next MXU pass
        cl = h32.shape[-1]
        chunk_max = jnp.max(h32.reshape(tm, kc, cl), axis=1)   # (tm, Cout_p)

        # Accumulate the running max directly in the resident output block.
        @pl.when(j == 0)
        def _first():
            out_ref[...] = chunk_max

        @pl.when(j > 0)
        def _more():
            out_ref[...] = jnp.maximum(out_ref[...], chunk_max)

    return kernel


def mlp_and_max(x, weights, biases, *, tm_target=256):
    """x: (M, K, C0) f32;  weights[i]: (Ci, Ci+1);  biases[i]: (Ci+1,).

    Returns (M, C_last) f32 = max_k relu(bn(conv(x)))  (BN folded into W, b).
    """
    assert len(weights) == len(biases) >= 1
    M, K, C0 = x.shape
    c_last = weights[-1].shape[1]

    # ---- pad channels: lane-dense when large, sublane multiple otherwise ----
    c0p = _round_up(C0, 128) if C0 >= 64 else _round_up(C0, 8)
    w_pad, b_pad, layer_dims = [], [], []
    cin_p = c0p
    for w, b in zip(weights, biases):
        ci, co = w.shape
        cop = _round_up(co, 128)                        # lane-dense matmuls / store
        wp = jnp.zeros((cin_p, cop), jnp.float32).at[:ci, :co].set(
            w.astype(jnp.float32))
        bp = jnp.zeros((1, cop), jnp.float32).at[0, :co].set(
            b.astype(jnp.float32))
        w_pad.append(wp.astype(jnp.bfloat16))           # MXU-native bf16 weights
        b_pad.append(bp)                                # f32 bias, added post-matmul
        layer_dims.append((cin_p, cop))
        cin_p = cop
    c_last_p = cin_p

    # ---- tile selection, sized by per-generation VMEM budget ----
    budget = _vmem_budget_bytes()
    tm = kc = None
    # Pass 1: prefer dropping the K reduction axis entirely (kc == K).
    for t in _tm_candidates(M, tm_target):
        if _estimate_vmem_bytes(t, K, c0p, layer_dims, c_last_p) <= budget:
            tm, kc = t, K
            break
    # Pass 2: otherwise chunk K, largest (sublane-dense) chunk that fits.
    if tm is None:
        for t in _tm_candidates(M, tm_target):
            for cand in _kc_candidates(K):
                if _estimate_vmem_bytes(t, cand, c0p, layer_dims, c_last_p) <= budget:
                    tm, kc = t, cand
                    break
            if tm is not None:
                break
    if tm is None:                                      # last resort: smallest tiles
        tm, kc = _tm_candidates(M, tm_target)[-1], _kc_candidates(K)[-1]

    m_pad = _round_up(M, tm)
    m_blocks = m_pad // tm
    nk = K // kc

    # ---- pad + cast the streaming input; contiguous per-step slabs ----
    # TODO(synk): sample_and_group could emit padded bf16 directly to skip this
    # extra HBM pass over the largest streamed tensor.
    xp = jnp.pad(x.astype(jnp.bfloat16),
                 ((0, m_pad - M), (0, 0), (0, c0p - C0)))
    xq = (xp.reshape(m_blocks, tm, nk, kc, c0p)
            .transpose(2, 0, 1, 3, 4)
            .reshape(nk, m_blocks, tm * kc, c0p))       # one contiguous slab / step

    grid = (m_blocks, nk)

    x_block = (None, None, tm * kc, c0p)
    x_index = lambda i, j: (j, i, 0, 0)
    x_spec = pl.BlockSpec(x_block, x_index)
    if nk > 1 and hasattr(pl, "Buffered"):              # deeper pipelining on short steps
        try:
            x_spec = pl.BlockSpec(x_block, x_index, pipeline_mode=pl.Buffered(3))
        except TypeError:
            pass

    in_specs = [x_spec]
    args = [xq]
    for wp, bp in zip(w_pad, b_pad):
        ci, co = wp.shape
        in_specs.append(pl.BlockSpec((ci, co), lambda i, j: (0, 0)))  # resident
        in_specs.append(pl.BlockSpec((1, co), lambda i, j: (0, 0)))   # resident
        args.append(wp)
        args.append(bp)

    kernel = _make_mlp_max_kernel(len(weights), tm, kc)
    out = pl.pallas_call(
        kernel,
        out_shape=jax.ShapeDtypeStruct((m_pad, c_last_p), jnp.float32),
        grid=grid,
        in_specs=in_specs,
        out_specs=pl.BlockSpec((tm, c_last_p), lambda i, j: (i, 0)),
        compiler_params=pltpu.CompilerParams(
            dimension_semantics=("parallel", "arbitrary"),
            vmem_limit_bytes=budget),
    )(*args)
    return out[:M, :c_last]


# ----------------------------------------------------------------------------
# Sampling / grouping glue (plain JAX, data-dependent gathers)
# ----------------------------------------------------------------------------
def farthest_point_sample(xyz, npoint):
    # TODO(synk): torch starts FPS from randint(0, N); deterministic index 0 here.
    B, N, C = xyz.shape
    npoint = min(npoint, N)

    def body(i, state):
        centroids, distance, farthest = state
        centroids = centroids.at[:, i].set(farthest)
        centroid = jnp.take_along_axis(
            xyz, farthest[:, None, None], axis=1)          # (B, 1, C)
        dist = jnp.sum((xyz - centroid) ** 2, -1)          # (B, N)
        distance = jnp.minimum(distance, dist)
        farthest = jnp.argmax(distance, -1).astype(jnp.int32)
        return centroids, distance, farthest

    centroids = jnp.zeros((B, npoint), jnp.int32)
    distance = jnp.full((B, N), 1e10, jnp.float32)
    farthest = jnp.zeros((B,), jnp.int32)
    centroids, _, _ = jax.lax.fori_loop(
        0, npoint, body, (centroids, distance, farthest))
    return centroids


def index_points(points, idx):
    B = points.shape[0]
    batch_idx = jnp.arange(B).reshape((B,) + (1,) * (idx.ndim - 1))
    return points[batch_idx, idx]


def square_distance(src, dst):
    dist = -2.0 * jnp.matmul(src, jnp.swapaxes(dst, 1, 2))
    dist = dist + jnp.sum(src ** 2, -1)[..., None]
    dist = dist + jnp.sum(dst ** 2, -1)[:, None, :]
    return dist


def sample_and_group(npoint, radius, nsample, xyz, points):
    # Note: the reference module's sample_and_group never uses `radius`
    # (pure argsort-kNN), so this matches the spec.
    B, N, C = xyz.shape
    npoint = N if npoint is None else min(npoint, N)
    nsample = min(nsample, N)
    fps_idx = farthest_point_sample(xyz, npoint)
    new_xyz = index_points(xyz, fps_idx)                   # (B, S, 3)
    sqrdists = square_distance(new_xyz, xyz)               # (B, S, N)
    group_idx = jnp.argsort(sqrdists, axis=-1)[:, :, :nsample]
    grouped_xyz = index_points(xyz, group_idx)             # (B, S, K, 3)
    grouped_xyz_norm = grouped_xyz - new_xyz[:, :, None, :]
    if points is not None:
        grouped_points = index_points(points, group_idx)   # (B, S, K, D)
        new_points = jnp.concatenate([grouped_xyz_norm, grouped_points], -1)
    else:
        new_points = grouped_xyz_norm
    return new_xyz, new_points


def sample_and_group_all(xyz, points):
    B, N, C = xyz.shape
    new_xyz = jnp.zeros((B, 1, C), xyz.dtype)
    grouped_xyz = xyz.reshape(B, 1, N, C)
    if points is not None:
        new_points = jnp.concatenate(
            [grouped_xyz, points.reshape(B, 1, N, -1)], -1)
    else:
        new_points = grouped_xyz
    return new_xyz, new_points


# ----------------------------------------------------------------------------
# Module equivalent
# ----------------------------------------------------------------------------
def init_params(key, in_channel, mlp):
    """Conv2d(1x1) weight/bias + BatchNorm2d affine and running stats."""
    params = []
    last = in_channel
    for oc in mlp:
        key, kw, kb, kg, kbe, km, kv = jax.random.split(key, 7)
        W = 0.1 * jax.random.normal(kw, (oc, last), jnp.float32)   # (Cout, Cin)
        cb = 0.1 * jax.random.normal(kb, (oc,), jnp.float32)
        gamma = 1.0 + 0.1 * jax.random.normal(kg, (oc,), jnp.float32)
        beta = 0.1 * jax.random.normal(kbe, (oc,), jnp.float32)
        rmean = 0.05 * jax.random.normal(km, (oc,), jnp.float32)
        rvar = 1.0 + 0.1 * jax.random.uniform(kv, (oc,), jnp.float32)
        params.append((W, cb, gamma, beta, rmean, rvar))
        last = oc
    return params


def fold_bn(params, eps=1e-5):
    """Fold eval-mode BatchNorm (arbitrary running stats) into the conv."""
    # TODO(synk): training-mode BatchNorm (batch statistics) not reproduced.
    weights, biases = [], []
    for W, cb, gamma, beta, rmean, rvar in params:
        scale = gamma / jnp.sqrt(rvar + eps)
        W_eff = W.T * scale[None, :]                   # (Cin, Cout)
        b_eff = (cb - rmean) * scale + beta            # (Cout,)
        weights.append(W_eff)
        biases.append(b_eff)
    return weights, biases


def pointnet_set_abstraction(xyz, points, npoint, radius, nsample, params):
    if npoint is not None:
        new_xyz, new_points = sample_and_group(npoint, radius, nsample, xyz, points)
    else:
        new_xyz, new_points = sample_and_group_all(xyz, points)

    B, S, K, C0 = new_points.shape
    weights, biases = fold_bn(params)

    x = new_points.reshape(B * S, K, C0).astype(jnp.float32)
    out = mlp_and_max(x, weights, biases)              # (B*S, C_last)  -- Pallas
    c_last = weights[-1].shape[1]
    new_feats = out.reshape(B, S, c_last)              # == torch (B, C, S).permute(0,2,1)
    return new_xyz, new_feats


# ----------------------------------------------------------------------------
if __name__ == "__main__":
    key = jax.random.PRNGKey(0)
    B, N, D = 2, 16, 4
    npoint, radius, nsample = 8, 0.4, 8
    in_channel = 3 + D
    mlp = [16, 32]

    k_xyz, k_pts, k_par = jax.random.split(key, 3)
    xyz = jax.random.normal(k_xyz, (B, N, 3), jnp.float32)
    points = jax.random.normal(k_pts, (B, N, D), jnp.float32)
    params = init_params(k_par, in_channel, mlp)

    new_xyz, new_points_out = pointnet_set_abstraction(
        xyz, points, npoint, radius, nsample, params)
    jax.block_until_ready((new_xyz, new_points_out))

    assert new_xyz.shape == (B, npoint, 3)
    assert new_points_out.shape == (B, npoint, mlp[-1])

    # pure-JAX f32 reference (unfolded eval-mode BN) for the MLP + max stage
    _, grouped = sample_and_group(npoint, radius, nsample, xyz, points)
    ref = grouped.astype(jnp.float32)
    eps = 1e-5
    for W, cb, gamma, beta, rmean, rvar in params:
        h = jnp.einsum("bskc,oc->bsko", ref, W) + cb
        h = (h - rmean) / jnp.sqrt(rvar + eps) * gamma + beta
        ref = jnp.maximum(h, 0.0)
    ref = jnp.max(ref, axis=2)
    max_err = float(jnp.max(jnp.abs(new_points_out - ref)))
    assert jnp.allclose(new_points_out, ref, atol=3e-2, rtol=3e-2), max_err

    print("KERNEL_OK")
</pallas_src>

<mosaic_0001>
module attributes {stable_mosaic.version = 11 : i64} {
  func.func @kernel(%arg0: i32, %arg1: i32, %arg2: memref<1x1x128x8xbf16, #tpu.memory_space<vmem>>, %arg3: memref<8x128xbf16, #tpu.memory_space<vmem>>, %arg4: memref<1x128xf32, #tpu.memory_space<vmem>>, %arg5: memref<128x128xbf16, #tpu.memory_space<vmem>>, %arg6: memref<1x128xf32, #tpu.memory_space<vmem>>, %arg7: memref<16x128xf32, #tpu.memory_space<vmem>>) attributes {dimension_semantics = [#tpu.dimension_semantics<parallel>, #tpu.dimension_semantics<arbitrary>], iteration_bounds = array<i64: 1, 1>, scalar_prefetch = 0 : i64, scratch_operands = 0 : i64, tpu.core_type = #tpu.core_type<tc>, window_params = [{transform_indices = @transform_0, window_bounds = array<i64: 1, 1, 128, 8>}, {pipeline_mode = #tpu.pipeline_mode<synchronous>, transform_indices = @transform_1, window_bounds = array<i64: 8, 128>}, {pipeline_mode = #tpu.pipeline_mode<synchronous>, transform_indices = @transform_2, window_bounds = array<i64: 1, 128>}, {pipeline_mode = #tpu.pipeline_mode<synchronous>, transform_indices = @transform_3, window_bounds = array<i64: 128, 128>}, {pipeline_mode = #tpu.pipeline_mode<synchronous>, transform_indices = @transform_4, window_bounds = array<i64: 1, 128>}, {transform_indices = @transform_5, window_bounds = array<i64: 16, 128>}]} {
    %c0 = arith.constant 0 : index
    %c0_0 = arith.constant 0 : index
    %c0_1 = arith.constant 0 : index
    %c0_2 = arith.constant 0 : index
    %0 = vector.load %arg2[%c0, %c0_0, %c0_1, %c0_2] : memref<1x1x128x8xbf16, #tpu.memory_space<vmem>>, vector<1x1x128x8xbf16>
    %1 = vector.shape_cast %0 : vector<1x1x128x8xbf16> to vector<128x8xbf16>
    %c0_3 = arith.constant 0 : index
    %c0_4 = arith.constant 0 : index
    %2 = vector.load %arg3[%c0_3, %c0_4] : memref<8x128xbf16, #tpu.memory_space<vmem>>, vector<8x128xbf16>
    %c0_5 = arith.constant 0 : index
    %c0_6 = arith.constant 0 : index
    %3 = vector.load %arg4[%c0_5, %c0_6] : memref<1x128xf32, #tpu.memory_space<vmem>>, vector<1x128xf32>
    %cst = arith.constant dense<0.000000e+00> : vector<128x128xf32>
    %4 = tpu.matmul %1, %2, %cst {dimension_numbers = #tpu.dot_dimension_numbers<[1], [0], [0], [1], [0, 0, 1, 1], [], []>} : vector<128x8xbf16>, vector<8x128xbf16>, vector<128x128xf32> -> vector<128x128xf32>
    %5 = vector.broadcast %3 : vector<1x128xf32> to vector<128x128xf32>
    %6 = arith.addf %4, %5 : vector<128x128xf32>
    %cst_7 = arith.constant 0.000000e+00 : f32
    %7 = vector.broadcast %cst_7 : f32 to vector<128x128xf32>
    %8 = arith.maximumf %6, %7 : vector<128x128xf32>
    %9 = arith.truncf %8 : vector<128x128xf32> to vector<128x128xbf16>
    %c0_8 = arith.constant 0 : index
    %c0_9 = arith.constant 0 : index
    %10 = vector.load %arg5[%c0_8, %c0_9] : memref<128x128xbf16, #tpu.memory_space<vmem>>, vector<128x128xbf16>
    %c0_10 = arith.constant 0 : index
    %c0_11 = arith.constant 0 : index
    %11 = vector.load %arg6[%c0_10, %c0_11] : memref<1x128xf32, #tpu.memory_space<vmem>>, vector<1x128xf32>
    %cst_12 = arith.constant dense<0.000000e+00> : vector<128x128xf32>
    %12 = tpu.matmul %9, %10, %cst_12 {dimension_numbers = #tpu.dot_dimension_numbers<[1], [0], [0], [1], [0, 0, 1, 1], [], []>} : vector<128x128xbf16>, vector<128x128xbf16>, vector<128x128xf32> -> vector<128x128xf32>
    %13 = vector.broadcast %11 : vector<1x128xf32> to vector<128x128xf32>
    %14 = arith.addf %12, %13 : vector<128x128xf32>
    %cst_13 = arith.constant 0.000000e+00 : f32
    %15 = vector.broadcast %cst_13 : f32 to vector<128x128xf32>
    %16 = arith.maximumf %14, %15 : vector<128x128xf32>
    %17 = vector.shape_cast %16 : vector<128x128xf32> to vector<16x8x128xf32>
    %cst_14 = arith.constant dense<0xFF800000> : vector<16x128xf32>
    %18 = vector.multi_reduction <maximumf>, %17, %cst_14 [1] : vector<16x8x128xf32> to vector<16x128xf32>
    %c0_i32 = arith.constant 0 : i32
    %19 = arith.cmpi eq, %arg1, %c0_i32 : i32
    %20 = arith.extui %19 : i1 to i32
    %c0_i32_15 = arith.constant 0 : i32
    %21 = arith.cmpi ne, %20, %c0_i32_15 : i32
    scf.if %21 {
      %c0_18 = arith.constant 0 : index
      %c0_19 = arith.constant 0 : index
      %25 = vector.load %arg7[%c0_18, %c0_19] : memref<16x128xf32, #tpu.memory_space<vmem>>, vector<16x128xf32>
      tpu.vector_store %arg7[%c0_18, %c0_19], %18 {strides = array<i32>} : memref<16x128xf32, #tpu.memory_space<vmem>>, vector<16x128xf32>,
    } else {
    }
    %c0_i32_16 = arith.constant 0 : i32
    %22 = arith.cmpi sgt, %arg1, %c0_i32_16 : i32
    %23 = arith.extui %22 : i1 to i32
    %c0_i32_17 = arith.constant 0 : i32
    %24 = arith.cmpi ne, %23, %c0_i32_17 : i32
    scf.if %24 {
      %c0_18 = arith.constant 0 : index
      %c0_19 = arith.constant 0 : index
      %25 = vector.load %arg7[%c0_18, %c0_19] : memref<16x128xf32, #tpu.memory_space<vmem>>, vector<16x128xf32>
      %26 = arith.maximumf %25, %18 : vector<16x128xf32>
      %c0_20 = arith.constant 0 : index
      %c0_21 = arith.constant 0 : index
      %27 = vector.load %arg7[%c0_20, %c0_21] : memref<16x128xf32, #tpu.memory_space<vmem>>, vector<16x128xf32>
      tpu.vector_store %arg7[%c0_20, %c0_21], %26 {strides = array<i32>} : memref<16x128xf32, #tpu.memory_space<vmem>>, vector<16x128xf32>,
    } else {
    }
    return
  }
  func.func @transform_0(%arg0: i32, %arg1: i32) -> (i32, i32, i32, i32) {
    %c0_i32 = arith.constant 0 : i32
    %c0_i32_0 = arith.constant 0 : i32
    %c0_i32_1 = arith.constant 0 : i32
    return %arg1, %arg0, %c0_i32, %c0_i32_0 : i32, i32, i32, i32
  }
  func.func @transform_1(%arg0: i32, %arg1: i32) -> (i32, i32) {
    %c0_i32 = arith.constant 0 : i32
    %c0_i32_0 = arith.constant 0 : i32
    %c0_i32_1 = arith.constant 0 : i32
    return %c0_i32, %c0_i32_0 : i32, i32
  }
  func.func @transform_2(%arg0: i32, %arg1: i32) -> (i32, i32) {
    %c0_i32 = arith.constant 0 : i32
    %c0_i32_0 = arith.constant 0 : i32
    %c0_i32_1 = arith.constant 0 : i32
    return %c0_i32, %c0_i32_0 : i32, i32
  }
  func.func @transform_3(%arg0: i32, %arg1: i32) -> (i32, i32) {
    %c0_i32 = arith.constant 0 : i32
    %c0_i32_0 = arith.constant 0 : i32
    %c0_i32_1 = arith.constant 0 : i32
    return %c0_i32, %c0_i32_0 : i32, i32
  }
  func.func @transform_4(%arg0: i32, %arg1: i32) -> (i32, i32) {
    %c0_i32 = arith.constant 0 : i32
    %c0_i32_0 = arith.constant 0 : i32
    %c0_i32_1 = arith.constant 0 : i32
    return %c0_i32, %c0_i32_0 : i32, i32
  }
  func.func @transform_5(%arg0: i32, %arg1: i32) -> (i32, i32) {
    %c0_i32 = arith.constant 0 : i32
    %c0_i32_0 = arith.constant 0 : i32
    return %arg0, %c0_i32 : i32, i32
  }
}

</mosaic_0001>

<llo_original>
// kernel: tpu_custom_call.1
$region0: #{tpu_custom_call.1}
  #allocation0 [shape = 'u32[]', space=smem, size = 0x4, offset = 0x4, fixed_abs, tag = 'smem constant byte address 0x4 - core index']
  #allocation1 [shape = 'u32[144,128]{1,0:T(1,128)}', space=vmem, size = 0x12000, scoped, tag = 'internal scratch']
  %s0 = inlined_call_operand.vmem [shape: bf16[1,1,128,8], index: 0, kind: input, shape index: {}]
  %s1 = inlined_call_operand.vmem [shape: bf16[8,128], index: 1, kind: input, shape index: {}]
  %s2 = inlined_call_operand.vmem [shape: f32[1,128], index: 2, kind: input, shape index: {}]
  %s3 = inlined_call_operand.vmem [shape: bf16[128,128], index: 3, kind: input, shape index: {}]
  %s4 = inlined_call_operand.vmem [shape: f32[1,128], index: 4, kind: input, shape index: {}]
  %s5 = inlined_call_operand.hbm [shape: f32[16,128], index: 5, kind: output, shape index: {}]
  %s6 = sld [smem:[#allocation0]]
  $region38: #{tpu_custom_call.1} parent=0
    _
  %s8 = ssub.s32 1, %s6
  %s9 = scalar_select 0, %s8, %s6
  $region1: #{tpu_custom_call.1} parent=0
    #allocation2 [shape = 'u8[8192]{0}', space=vmem, size = 0x2000, scoped, tag = 'output window, operand 0, single buffered']
    #allocation3 [shape = 's32[1]{0}', space=sflag, size = 0x4, scoped, tag = 'scoped memory for tpu_custom_call.1']
    %10 = vsyncpa [#allocation3], 0
    // Predicated region
    $region2: #{tpu_custom_call.1} parent=1 // pred_check
      _
    $region3: #{tpu_custom_call.1} parent=1 // pred_check_branch
      %12 = sbr.rel (0) target = $region5
    $region4: #{tpu_custom_call.1} parent=1 // pred_region
      _
    $region5: #{tpu_custom_call.1} parent=1 // pred_fallthru
      _
    // Predicated region
    $region6: #{tpu_custom_call.1} parent=1 // pred_check
      _
    $region7: #{tpu_custom_call.1} parent=1 // pred_check_branch
      %14 = sbr.rel (0) target = $region9
    $region8: #{tpu_custom_call.1} parent=1 // pred_region
      _
    $region9: #{tpu_custom_call.1} parent=1 // pred_fallthru
      _
    // Predicated region
    $region10: #{tpu_custom_call.1} parent=1 // pred_check
      _
    $region11: #{tpu_custom_call.1} parent=1 // pred_check_branch
      %16 = sbr.rel (0) target = $region13
    $region12: #{tpu_custom_call.1} parent=1 // pred_region
      _
    $region13: #{tpu_custom_call.1} parent=1 // pred_fallthru
      _
    // Predicated region
    $region14: #{tpu_custom_call.1} parent=1 // pred_check
      _
    $region15: #{tpu_custom_call.1} parent=1 // pred_check_branch
      %18 = sbr.rel (0) target = $region17
    $region16: #{tpu_custom_call.1} parent=1 // pred_region
      _
    $region17: #{tpu_custom_call.1} parent=1 // pred_fallthru
      _
    // Predicated region
    $region18: #{tpu_custom_call.1} parent=1 // pred_check
      _
    $region19: #{tpu_custom_call.1} parent=1 // pred_check_branch
      %20 = sbr.rel (0) target = $region21
    $region20: #{tpu_custom_call.1} parent=1 // pred_region
      _
    $region21: #{tpu_custom_call.1} parent=1 // pred_fallthru
      _
    %v22 = vld [vmem:[%s0] sm:$0xf]
    %v23 = vld [vmem:[%s0 + $0x4] sm:$0xf]
    %v24 = vld [vmem:[%s0 + $0x8] sm:$0xf]
    %v25 = vld [vmem:[%s0 + $0xc] sm:$0xf]
    %v26 = vld [vmem:[%s0 + $0x10] sm:$0xf]
    %v27 = vld [vmem:[%s0 + $0x14] sm:$0xf]
    %v28 = vld [vmem:[%s0 + $0x18] sm:$0xf]
    %v29 = vld [vmem:[%s0 + $0x1c] sm:$0xf]
    %v30 = vld [vmem:[%s0 + $0x20] sm:$0xf]
    %v31 = vld [vmem:[%s0 + $0x24] sm:$0xf]
    %v32 = vld [vmem:[%s0 + $0x28] sm:$0xf]
    %v33 = vld [vmem:[%s0 + $0x2c] sm:$0xf]
    %v34 = vld [vmem:[%s0 + $0x30] sm:$0xf]
    %v35 = vld [vmem:[%s0 + $0x34] sm:$0xf]
    %v36 = vld [vmem:[%s0 + $0x38] sm:$0xf]
    %v37 = vld [vmem:[%s0 + $0x3c] sm:$0xf]
    %v38 = vld [vmem:[%s1] sm:$0xf]
    %v39 = vld [vmem:[%s2] sm:$0x1]
    %v41 = vlaneseq
    %v42 = vshrl.u32 %v41, 7
    %v43 = vsub.s32 0, %v42
    %v44 = vrot.slane %v39, %v43
    %v62 = vunpack.c.l.b16 %v22
    %v63 = vunpack.c.l.b16 %v23
    %v64 = vunpack.c.l.b16 %v24
    %v65 = vunpack.c.l.b16 %v25
    %v66 = vunpack.c.l.b16 %v26
    %v67 = vunpack.c.l.b16 %v27
    %v68 = vunpack.c.l.b16 %v28
    %v69 = vunpack.c.l.b16 %v29
    %v70 = vunpack.c.l.b16 %v30
    %v71 = vunpack.c.l.b16 %v31
    %v72 = vunpack.c.l.b16 %v32
    %v73 = vunpack.c.l.b16 %v33
    %v74 = vunpack.c.l.b16 %v34
    %v75 = vunpack.c.l.b16 %v35
    %v76 = vunpack.c.l.b16 %v36
    %v77 = vunpack.c.l.b16 %v37
    %v78 = vpack.c.b16 %v63, %v62
    %v79 = vpack.c.b16 %v65, %v64
    %v80 = vpack.c.b16 %v67, %v66
    %v81 = vpack.c.b16 %v69, %v68
    %v82 = vpack.c.b16 %v71, %v70
    %v83 = vpack.c.b16 %v73, %v72
    %v84 = vpack.c.b16 %v75, %v74
    %v85 = vpack.c.b16 %v77, %v76
    %vm86 = vcmask 64512
    %v88 = vsel %vm86, %v78, 0
    %v91 = vsel %vm86, %v79, 0
    %v94 = vsel %vm86, %v80, 0
    %v97 = vsel %vm86, %v81, 0
    %v100 = vsel %vm86, %v82, 0
    %v103 = vsel %vm86, %v83, 0
    %v106 = vsel %vm86, %v84, 0
    %v109 = vsel %vm86, %v85, 0
    %vm111 = vcmask 1043456
    %v113 = vsel %vm111, %v38, 0
    %115 = vmatprep.subr.bf16.mxu0 0
    %116 = vmatpush1.bf16.msra.mxu0 0
    %117 = vmatprep.subr.bf16.mxu0 0
    %118 = vmatpush1.bf16.msra.mxu0 0
    %119 = vmatprep.subr.bf16.mxu0 0
    %120 = vmatpush1.bf16.msra.mxu0 0
    %121 = vmatprep.subr.bf16.mxu0 0
    %122 = vmatpush1.bf16.msra.mxu0 0
    %123 = vmatprep.subr.bf16.mxu0 0
    %124 = vmatpush1.bf16.msra.mxu0 0
    %125 = vmatprep.subr.bf16.mxu0 0
    %126 = vmatpush1.bf16.msra.mxu0 0
    %127 = vmatprep.subr.bf16.mxu0 0
    %128 = vmatpush1.bf16.msra.mxu0 0
    %129 = vmatprep.subr.bf16.mxu0 0
    %130 = vmatpush1.bf16.msra.mxu0 %v113
    %131 = vmatprep.subr.bf16.mxu0 0
    %132 = vmatpush2.bf16.msra.mxu0 0
    %133 = vmatprep.subr.bf16.mxu0 0
    %134 = vmatpush2.bf16.msra.mxu0 0
    %135 = vmatprep.subr.bf16.mxu0 0
    %136 = vmatpush2.bf16.msra.mxu0 0
    %137 = vmatprep.subr.bf16.mxu0 0
    %138 = vmatpush2.bf16.msra.mxu0 0
    %139 = vmatprep.subr.bf16.mxu0 0
    %140 = vmatpush2.bf16.msra.mxu0 0
    %141 = vmatprep.subr.bf16.mxu0 0
    %142 = vmatpush2.bf16.msra.mxu0 0
    %143 = vmatprep.subr.bf16.mxu0 0
    %144 = vmatpush2.bf16.msra.mxu0 0
    %145 = vmatprep.subr.bf16.mxu0 0
    %146 = vmatpush2.bf16.msra.mxu0 0
    %147 = vmatprep.mubr.bf16.mxu0 0
    %148 = vmatmul.mubr.bf16.gmra.mxu0 %v88
    %v149 = vpop.f32.mrf.mxu0
    %v150 = vadd.f32 %v44, %v149
    %v151 = vpop.f32.mrf.mxu0
    %v152 = vpop.f32.mrf.mxu0
    %v153 = vadd.f32 %v44, %v152
    %v154 = vpop.f32.mrf.mxu0
    %155 = vmatprep.mubr.bf16.mxu0 0
    %156 = vmatmul.mubr.bf16.gmra.mxu0 %v91
    %v157 = vpop.f32.mrf.mxu0
    %v158 = vadd.f32 %v44, %v157
    %v159 = vpop.f32.mrf.mxu0
    %v160 = vpop.f32.mrf.mxu0
    %v161 = vadd.f32 %v44, %v160
    %v162 = vpop.f32.mrf.mxu0
    %163 = vmatprep.mubr.bf16.mxu0 0
    %164 = vmatmul.mubr.bf16.gmra.mxu0 %v94
    %v165 = vpop.f32.mrf.mxu0
    %v166 = vadd.f32 %v44, %v165
    %v167 = vpop.f32.mrf.mxu0
    %v168 = vpop.f32.mrf.mxu0
    %v169 = vadd.f32 %v44, %v168
    %v170 = vpop.f32.mrf.mxu0
    %171 = vmatprep.mubr.bf16.mxu0 0
    %172 = vmatmul.mubr.bf16.gmra.mxu0 %v97
    %v173 = vpop.f32.mrf.mxu0
    %v174 = vadd.f32 %v44, %v173
    %v175 = vpop.f32.mrf.mxu0
    %v176 = vpop.f32.mrf.mxu0
    %v177 = vadd.f32 %v44, %v176
    %v178 = vpop.f32.mrf.mxu0
    %179 = vmatprep.mubr.bf16.mxu0 0
    %180 = vmatmul.mubr.bf16.gmra.mxu0 %v100
    %v181 = vpop.f32.mrf.mxu0
    %v182 = vadd.f32 %v44, %v181
    %v183 = vpop.f32.mrf.mxu0
    %v184 = vpop.f32.mrf.mxu0
    %v185 = vadd.f32 %v44, %v184
    %v186 = vpop.f32.mrf.mxu0
    %187 = vmatprep.mubr.bf16.mxu0 0
    %188 = vmatmul.mubr.bf16.gmra.mxu0 %v103
    %v189 = vpop.f32.mrf.mxu0
    %v190 = vadd.f32 %v44, %v189
    %v191 = vpop.f32.mrf.mxu0
    %v192 = vpop.f32.mrf.mxu0
    %v193 = vadd.f32 %v44, %v192
    %v194 = vpop.f32.mrf.mxu0
    %195 = vmatprep.mubr.bf16.mxu0 0
    %196 = vmatmul.mubr.bf16.gmra.mxu0 %v106
    %v197 = vpop.f32.mrf.mxu0
    %v198 = vadd.f32 %v44, %v197
    %v199 = vpop.f32.mrf.mxu0
    %v200 = vpop.f32.mrf.mxu0
    %v201 = vadd.f32 %v44, %v200
    %v202 = vpop.f32.mrf.mxu0
    %203 = vmatprep.mubr.bf16.mxu0 0
    %204 = vmatmul.mubr.bf16.gmra.mxu0 %v109
    %v205 = vpop.f32.mrf.mxu0
    %v206 = vadd.f32 %v44, %v205
    %v207 = vpop.f32.mrf.mxu0
    %v208 = vpop.f32.mrf.mxu0
    %v209 = vadd.f32 %v44, %v208
    %v210 = vpop.f32.mrf.mxu0
    %211 = vdwg.mxu0
    %v212 = vmax.f32 %v150, 0.0
    %v213 = vmax.f32 %v153, 0.0
    %v214 = vmax.f32 %v158, 0.0
    %v215 = vmax.f32 %v161, 0.0
    %v216 = vmax.f32 %v166, 0.0
    %v217 = vmax.f32 %v169, 0.0
    %v218 = vmax.f32 %v174, 0.0
    %v219 = vmax.f32 %v177, 0.0
    %v220 = vmax.f32 %v182, 0.0
    %v221 = vmax.f32 %v185, 0.0
    %v222 = vmax.f32 %v190, 0.0
    %v223 = vmax.f32 %v193, 0.0
    %v224 = vmax.f32 %v198, 0.0
    %v225 = vmax.f32 %v201, 0.0
    %v226 = vmax.f32 %v206, 0.0
    %v227 = vmax.f32 %v209, 0.0
    %v228 = vpack.c.bf16 %v213, %v212
    %v229 = vpack.c.bf16 %v215, %v214
    %v230 = vpack.c.bf16 %v217, %v216
    %v231 = vpack.c.bf16 %v219, %v218
    %v232 = vpack.c.bf16 %v221, %v220
    %v233 = vpack.c.bf16 %v223, %v222
    %v234 = vpack.c.bf16 %v225, %v224
    %v235 = vpack.c.bf16 %v227, %v226
    %v236 = vld [vmem:[%s3] sm:$0xf]
    %v237 = vld [vmem:[%s3 + $0x4] sm:$0xf]
    %v238 = vld [vmem:[%s3 + $0x8] sm:$0xf]
    %v239 = vld [vmem:[%s3 + $0xc] sm:$0xf]
    %v240 = vld [vmem:[%s3 + $0x10] sm:$0xf]
    %v241 = vld [vmem:[%s3 + $0x14] sm:$0xf]
    %v242 = vld [vmem:[%s3 + $0x18] sm:$0xf]
    %v243 = vld [vmem:[%s3 + $0x1c] sm:$0xf]
    %v244 = vld [vmem:[%s3 + $0x20] sm:$0xf]
    %v245 = vld [vmem:[%s3 + $0x24] sm:$0xf]
    %v246 = vld [vmem:[%s3 + $0x28] sm:$0xf]
    %v247 = vld [vmem:[%s3 + $0x2c] sm:$0xf]
    %v248 = vld [vmem:[%s3 + $0x30] sm:$0xf]
    %v249 = vld [vmem:[%s3 + $0x34] sm:$0xf]
    %v250 = vld [vmem:[%s3 + $0x38] sm:$0xf]
    %v251 = vld [vmem:[%s3 + $0x3c] sm:$0xf]
    %v252 = vld [vmem:[%s4] sm:$0x1]
    %v254 = vlaneseq
    %v255 = vshrl.u32 %v254, 7
    %v256 = vsub.s32 0, %v255
    %v257 = vrot.slane %v252, %v256
    %v275 = vunpack.c.l.b16 %v236
    %v276 = vunpack.c.l.b16 %v237
    %v277 = vunpack.c.l.b16 %v238
    %v278 = vunpack.c.l.b16 %v239
    %v279 = vunpack.c.l.b16 %v240
    %v280 = vunpack.c.l.b16 %v241
    %v281 = vunpack.c.l.b16 %v242
    %v282 = vunpack.c.l.b16 %v243
    %v283 = vunpack.c.l.b16 %v244
    %v284 = vunpack.c.l.b16 %v245
    %v285 = vunpack.c.l.b16 %v246
    %v286 = vunpack.c.l.b16 %v247
    %v287 = vunpack.c.l.b16 %v248
    %v288 = vunpack.c.l.b16 %v249
    %v289 = vunpack.c.l.b16 %v250
    %v290 = vunpack.c.l.b16 %v251
    %v291 = vpack.c.b16 %v276, %v275
    %v292 = vpack.c.b16 %v278, %v277
    %v293 = vpack.c.b16 %v280, %v279
    %v294 = vpack.c.b16 %v282, %v281
    %v295 = vpack.c.b16 %v284, %v283
    %v296 = vpack.c.b16 %v286, %v285
    %v297 = vpack.c.b16 %v288, %v287
    %v298 = vpack.c.b16 %v290, %v289
    %307 = vmatprep.subr.bf16.mxu0 0
    %308 = vmatpush1.bf16.msra.mxu0 %v298
    %309 = vmatprep.subr.bf16.mxu0 0
    %310 = vmatpush1.bf16.msra.mxu0 %v297
    %311 = vmatprep.subr.bf16.mxu0 0
    %312 = vmatpush1.bf16.msra.mxu0 %v296
    %313 = vmatprep.subr.bf16.mxu0 0
    %314 = vmatpush1.bf16.msra.mxu0 %v295
    %315 = vmatprep.subr.bf16.mxu0 0
    %316 = vmatpush1.bf16.msra.mxu0 %v294
    %317 = vmatprep.subr.bf16.mxu0 0
    %318 = vmatpush1.bf16.msra.mxu0 %v293
    %319 = vmatprep.subr.bf16.mxu0 0
    %320 = vmatpush1.bf16.msra.mxu0 %v292
    %321 = vmatprep.subr.bf16.mxu0 0
    %322 = vmatpush1.bf16.msra.mxu0 %v291
    %323 = vmatprep.subr.bf16.mxu0 0
    %324 = vmatpush2.bf16.msra.mxu0 0
    %325 = vmatprep.subr.bf16.mxu0 0
    %326 = vmatpush2.bf16.msra.mxu0 0
    %327 = vmatprep.subr.bf16.mxu0 0
    %328 = vmatpush2.bf16.msra.mxu0 0
    %329 = vmatprep.subr.bf16.mxu0 0
    %330 = vmatpush2.bf16.msra.mxu0 0
    %331 = vmatprep.subr.bf16.mxu0 0
    %332 = vmatpush2.bf16.msra.mxu0 0
    %333 = vmatprep.subr.bf16.mxu0 0
    %334 = vmatpush2.bf16.msra.mxu0 0
    %335 = vmatprep.subr.bf16.mxu0 0
    %336 = vmatpush2.bf16.msra.mxu0 0
    %337 = vmatprep.subr.bf16.mxu0 0
    %338 = vmatpush2.bf16.msra.mxu0 0
    %339 = vmatprep.mubr.bf16.mxu0 0
    %340 = vmatmul.mubr.bf16.gmra.mxu0 %v228
    %v341 = vpop.f32.mrf.mxu0
    %v342 = vadd.f32 %v257, %v341
    %v343 = vpop.f32.mrf.mxu0
    %v344 = vpop.f32.mrf.mxu0
    %v345 = vadd.f32 %v257, %v344
    %v346 = vpop.f32.mrf.mxu0
    %347 = vmatprep.mubr.bf16.mxu0 0
    %348 = vmatmul.mubr.bf16.gmra.mxu0 %v229
    %v349 = vpop.f32.mrf.mxu0
    %v350 = vadd.f32 %v257, %v349
    %v351 = vpop.f32.mrf.mxu0
    %v352 = vpop.f32.mrf.mxu0
    %v353 = vadd.f32 %v257, %v352
    %v354 = vpop.f32.mrf.mxu0
    %355 = vmatprep.mubr.bf16.mxu0 0
    %356 = vmatmul.mubr.bf16.gmra.mxu0 %v230
    %v357 = vpop.f32.mrf.mxu0
    %v358 = vadd.f32 %v257, %v357
    %v359 = vpop.f32.mrf.mxu0
    %v360 = vpop.f32.mrf.mxu0
    %v361 = vadd.f32 %v257, %v360
    %v362 = vpop.f32.mrf.mxu0
    %363 = vmatprep.mubr.bf16.mxu0 0
    %364 = vmatmul.mubr.bf16.gmra.mxu0 %v231
    %v365 = vpop.f32.mrf.mxu0
    %v366 = vadd.f32 %v257, %v365
    %v367 = vpop.f32.mrf.mxu0
    %v368 = vpop.f32.mrf.mxu0
    %v369 = vadd.f32 %v257, %v368
    %v370 = vpop.f32.mrf.mxu0
    %371 = vmatprep.mubr.bf16.mxu0 0
    %372 = vmatmul.mubr.bf16.gmra.mxu0 %v232
    %v373 = vpop.f32.mrf.mxu0
    %v374 = vadd.f32 %v257, %v373
    %v375 = vpop.f32.mrf.mxu0
    %v376 = vpop.f32.mrf.mxu0
    %v377 = vadd.f32 %v257, %v376
    %v378 = vpop.f32.mrf.mxu0
    %379 = vmatprep.mubr.bf16.mxu0 0
    %380 = vmatmul.mubr.bf16.gmra.mxu0 %v233
    %v381 = vpop.f32.mrf.mxu0
    %v382 = vadd.f32 %v257, %v381
    %v383 = vpop.f32.mrf.mxu0
    %v384 = vpop.f32.mrf.mxu0
    %v385 = vadd.f32 %v257, %v384
    %v386 = vpop.f32.mrf.mxu0
    %387 = vmatprep.mubr.bf16.mxu0 0
    %388 = vmatmul.mubr.bf16.gmra.mxu0 %v234
    %v389 = vpop.f32.mrf.mxu0
    %v390 = vadd.f32 %v257, %v389
    %v391 = vpop.f32.mrf.mxu0
    %v392 = vpop.f32.mrf.mxu0
    %v393 = vadd.f32 %v257, %v392
    %v394 = vpop.f32.mrf.mxu0
    %395 = vmatprep.mubr.bf16.mxu0 0
    %396 = vmatmul.mubr.bf16.gmra.mxu0 %v235
    %v397 = vpop.f32.mrf.mxu0
    %v398 = vadd.f32 %v257, %v397
    %v399 = vpop.f32.mrf.mxu0
    %v400 = vpop.f32.mrf.mxu0
    %v401 = vadd.f32 %v257, %v400
    %v402 = vpop.f32.mrf.mxu0
    %403 = vdwg.mxu0
    %v404 = vmax.f32 %v342, 0.0
    %v405 = vmax.f32 %v345, 0.0
    %v406 = vmax.f32 %v350, 0.0
    %v407 = vmax.f32 %v353, 0.0
    %v408 = vmax.f32 %v358, 0.0
    %v409 = vmax.f32 %v361, 0.0
    %v410 = vmax.f32 %v366, 0.0
    %v411 = vmax.f32 %v369, 0.0
    %v412 = vmax.f32 %v374, 0.0
    %v413 = vmax.f32 %v377, 0.0
    %v414 = vmax.f32 %v382, 0.0
    %v415 = vmax.f32 %v385, 0.0
    %v416 = vmax.f32 %v390, 0.0
    %v417 = vmax.f32 %v393, 0.0
    %v418 = vmax.f32 %v398, 0.0
    %v419 = vmax.f32 %v401, 0.0
    %v420 = vrot.slane %v404, 4
    %v421 = vmax.f32 %v404, %v420
    %v422 = vrot.slane %v421, 2
    %v423 = vmax.f32 %v421, %v422
    %v424 = vrot.slane %v423, 1
    %v425 = vmax.f32 %v423, %v424
    %v426 = vrot.slane %v405, 4
    %v427 = vmax.f32 %v405, %v426
    %v428 = vrot.slane %v427, 2
    %v429 = vmax.f32 %v427, %v428
    %v430 = vrot.slane %v429, 1
    %v431 = vmax.f32 %v429, %v430
    %v432 = vrot.slane %v406, 4
    %v433 = vmax.f32 %v406, %v432
    %v434 = vrot.slane %v433, 2
    %v435 = vmax.f32 %v433, %v434
    %v436 = vrot.slane %v435, 1
    %v437 = vmax.f32 %v435, %v436
    %v438 = vrot.slane %v407, 4
    %v439 = vmax.f32 %v407, %v438
    %v440 = vrot.slane %v439, 2
    %v441 = vmax.f32 %v439, %v440
    %v442 = vrot.slane %v441, 1
    %v443 = vmax.f32 %v441, %v442
    %v444 = vrot.slane %v408, 4
    %v445 = vmax.f32 %v408, %v444
    %v446 = vrot.slane %v445, 2
    %v447 = vmax.f32 %v445, %v446
    %v448 = vrot.slane %v447, 1
    %v449 = vmax.f32 %v447, %v448
    %v450 = vrot.slane %v409, 4
    %v451 = vmax.f32 %v409, %v450
    %v452 = vrot.slane %v451, 2
    %v453 = vmax.f32 %v451, %v452
    %v454 = vrot.slane %v453, 1
    %v455 = vmax.f32 %v453, %v454
    %v456 = vrot.slane %v410, 4
    %v457 = vmax.f32 %v410, %v456
    %v458 = vrot.slane %v457, 2
    %v459 = vmax.f32 %v457, %v458
    %v460 = vrot.slane %v459, 1
    %v461 = vmax.f32 %v459, %v460
    %v462 = vrot.slane %v411, 4
    %v463 = vmax.f32 %v411, %v462
    %v464 = vrot.slane %v463, 2
    %v465 = vmax.f32 %v463, %v464
    %v466 = vrot.slane %v465, 1
    %v467 = vmax.f32 %v465, %v466
    %v468 = vrot.slane %v412, 4
    %v469 = vmax.f32 %v412, %v468
    %v470 = vrot.slane %v469, 2
    %v471 = vmax.f32 %v469, %v470
    %v472 = vrot.slane %v471, 1
    %v473 = vmax.f32 %v471, %v472
    %v474 = vrot.slane %v413, 4
    %v475 = vmax.f32 %v413, %v474
    %v476 = vrot.slane %v475, 2
    %v477 = vmax.f32 %v475, %v476
    %v478 = vrot.slane %v477, 1
    %v479 = vmax.f32 %v477, %v478
    %v480 = vrot.slane %v414, 4
    %v481 = vmax.f32 %v414, %v480
    %v482 = vrot.slane %v481, 2
    %v483 = vmax.f32 %v481, %v482
    %v484 = vrot.slane %v483, 1
    %v485 = vmax.f32 %v483, %v484
    %v486 = vrot.slane %v415, 4
    %v487 = vmax.f32 %v415, %v486
    %v488 = vrot.slane %v487, 2
    %v489 = vmax.f32 %v487, %v488
    %v490 = vrot.slane %v489, 1
    %v491 = vmax.f32 %v489, %v490
    %v492 = vrot.slane %v416, 4
    %v493 = vmax.f32 %v416, %v492
    %v494 = vrot.slane %v493, 2
    %v495 = vmax.f32 %v493, %v494
    %v496 = vrot.slane %v495, 1
    %v497 = vmax.f32 %v495, %v496
    %v498 = vrot.slane %v417, 4
    %v499 = vmax.f32 %v417, %v498
    %v500 = vrot.slane %v499, 2
    %v501 = vmax.f32 %v499, %v500
    %v502 = vrot.slane %v501, 1
    %v503 = vmax.f32 %v501, %v502
    %v504 = vrot.slane %v418, 4
    %v505 = vmax.f32 %v418, %v504
    %v506 = vrot.slane %v505, 2
    %v507 = vmax.f32 %v505, %v506
    %v508 = vrot.slane %v507, 1
    %v509 = vmax.f32 %v507, %v508
    %v510 = vrot.slane %v419, 4
    %v511 = vmax.f32 %v419, %v510
    %v512 = vrot.slane %v511, 2
    %v513 = vmax.f32 %v511, %v512
    %v514 = vrot.slane %v513, 1
    %v515 = vmax.f32 %v513, %v514
    %p516 = scmp.eq.s32.totalorder 0, 0
    // Predicated region
    $region22: #{tpu_custom_call.1} parent=1 // pred_check
      %p517 = pneg %p516
    $region23: #{tpu_custom_call.1} parent=1 // pred_check_branch
      %519 = sbr.rel (%p517) target = $region25
    $region24: #{tpu_custom_call.1} parent=1 // pred_region
      %vm536 = vcmask 1041409
      %v537 = vsel %vm536, %v431, %v425
      %vm538 = vcmask 1042434
      %v539 = vsel %vm538, %v437, %v537
      %vm540 = vcmask 1043459
      %v541 = vsel %vm540, %v443, %v539
      %vm542 = vcmask 1044484
      %v543 = vsel %vm542, %v449, %v541
      %vm544 = vcmask 1045509
      %v545 = vsel %vm544, %v455, %v543
      %vm546 = vcmask 1046534
      %v547 = vsel %vm546, %v461, %v545
      %vm548 = vcmask 1047559
      %v549 = vsel %vm548, %v467, %v547
      %v550 = vsel %vm536, %v479, %v473
      %v551 = vsel %vm538, %v485, %v550
      %v552 = vsel %vm540, %v491, %v551
      %v553 = vsel %vm542, %v497, %v552
      %v554 = vsel %vm544, %v503, %v553
      %v555 = vsel %vm546, %v509, %v554
      %v556 = vsel %vm548, %v515, %v555
      %559 = vst [vmem:[#allocation2] sm:$0xff] %v549
      %560 = vst [vmem:[#allocation2 + $0x8] sm:$0xff] %v556
    $region25: #{tpu_custom_call.1} parent=1 // pred_fallthru
      _
    %p561 = scmp.gt.s32.totalorder 0, 0
    // Predicated region
    $region26: #{tpu_custom_call.1} parent=1 // pred_check
      %p562 = pneg %p561
    $region27: #{tpu_custom_call.1} parent=1 // pred_check_branch
      %564 = sbr.rel (%p562) target = $region29
    $region28: #{tpu_custom_call.1} parent=1 // pred_region
      %v565 = vld [vmem:[#allocation2] sm:$0xff]
      %v566 = vld [vmem:[#allocation2 + $0x8] sm:$0xff]
      %vm583 = vcmask 1041409
      %v584 = vsel %vm583, %v431, %v425
      %vm585 = vcmask 1042434
      %v586 = vsel %vm585, %v437, %v584
      %vm587 = vcmask 1043459
      %v588 = vsel %vm587, %v443, %v586
      %vm589 = vcmask 1044484
      %v590 = vsel %vm589, %v449, %v588
      %vm591 = vcmask 1045509
      %v592 = vsel %vm591, %v455, %v590
      %vm593 = vcmask 1046534
      %v594 = vsel %vm593, %v461, %v592
      %vm595 = vcmask 1047559
      %v596 = vsel %vm595, %v467, %v594
      %v597 = vsel %vm583, %v479, %v473
      %v598 = vsel %vm585, %v485, %v597
      %v599 = vsel %vm587, %v491, %v598
      %v600 = vsel %vm589, %v497, %v599
      %v601 = vsel %vm591, %v503, %v600
      %v602 = vsel %vm593, %v509, %v601
      %v603 = vsel %vm595, %v515, %v602
      %v606 = vmax.f32 %v565, %v596
      %v607 = vmax.f32 %v566, %v603
      %608 = vst [vmem:[#allocation2] sm:$0xff] %v606
      %609 = vst [vmem:[#allocation2 + $0x8] sm:$0xff] %v607
    $region29: #{tpu_custom_call.1} parent=1 // pred_fallthru
      _
    // Predicated region
    $region30: #{tpu_custom_call.1} parent=1 // pred_check
      _
    $region31: #{tpu_custom_call.1} parent=1 // pred_check_branch
      %611 = sbr.rel (0) target = $region33
    $region32: #{tpu_custom_call.1} parent=1 // pred_region
      %s613 = ssub.s32 256, 256
      %614 = vsyncadd [#allocation3], %s613
      %s615 = sshll.u32 [#allocation2], 4
      %s616 = int_to_ptr.vmem [resolvable:$true] %s615
      %621 = dma.vmem_to_hbm [thread:$0]  %s616, 256, %s5, [#allocation3], 128, 128, 8
    $region33: #{tpu_custom_call.1} parent=1 // pred_fallthru
      _
    // Predicated region
    $region34: #{tpu_custom_call.1} parent=1 // pred_check
      _
    $region35: #{tpu_custom_call.1} parent=1 // pred_check_branch
      %623 = sbr.rel (0) target = $region37
    $region36: #{tpu_custom_call.1} parent=1 // pred_region
      %624 = dma.done [#allocation3], 256
    $region37: #{tpu_custom_call.1} parent=1 // pred_fallthru
      _
    %625 = vsyncpa [#allocation3], 1

</llo_original>
